<compile_context>
chip_gen: v5e
topology: v5e:2x2
jax: 0.10.0
libtpu: 0.0.40
codegen_flags: <defaults>
</compile_context>

<pallas_src>
import numpy as np
import jax
import jax.numpy as jnp
from jax import lax
from jax.experimental import pallas as pl
from jax.experimental.pallas import tpu as pltpu


def get_filter(filt_size=4):
    if filt_size == 1:
        a = np.array([1.0])
    elif filt_size == 2:
        a = np.array([1.0, 1.0])
    elif filt_size == 3:
        a = np.array([1.0, 2.0, 1.0])
    elif filt_size == 4:
        a = np.array([1.0, 3.0, 3.0, 1.0])
    elif filt_size == 5:
        a = np.array([1.0, 4.0, 6.0, 4.0, 1.0])
    elif filt_size == 6:
        a = np.array([1.0, 5.0, 10.0, 10.0, 5.0, 1.0])
    elif filt_size == 7:
        a = np.array([1.0, 6.0, 15.0, 20.0, 15.0, 6.0, 1.0])
    filt = a[:, None] * a[None, :]
    filt = filt / filt.sum()
    return filt.astype(np.float32)


# ----------------------------------------------------------------------------- #
# Kernel
# ----------------------------------------------------------------------------- #
def _upsample_kernel(x_ref, perm_ref, o_ref):
    # x_ref: (B, H, W) VMEM; perm_ref: (2*chunk, 2*chunk) f32; o_ref: (B, H, 4W).
    # Baked separable taps: filt*stride**2 = outer(b, b) with b = [1,3,3,1]/4.
    x = x_ref[...].astype(jnp.float32)
    Bb, Hh, Ww = x.shape
    two_chunk = perm_ref.shape[0]
    chunk = two_chunk // 2

    # ---- horizontal (column) 2-tap pass, replication clamp at the borders ------
    x_lf = jnp.concatenate([x[:, :, :1], x[:, :, :-1]], axis=2)   # x[n-1] (clamped)
    x_rt = jnp.concatenate([x[:, :, 1:], x[:, :, -1:]], axis=2)   # x[n+1] (clamped)
    even = 0.25 * x_lf + 0.75 * x                                 # -> output col 2n
    odd = 0.75 * x + 0.25 * x_rt                                  # -> output col 2n+1

    # ---- exact even/odd column interleave via 0/1 permutation on the MXU -------
    # (done ONCE, on the horizontally-filtered plane).  Chunked so K = N = 2*chunk.
    perm = perm_ref[...]
    pieces = []
    for c0 in range(0, Ww, chunk):
        c1 = min(c0 + chunk, Ww)
        e_c = even[:, :, c0:c1]
        o_c = odd[:, :, c0:c1]
        if c1 - c0 < chunk:  # ragged tail: zero-pad up to the perm width
            pad = jnp.zeros((Bb, Hh, chunk - (c1 - c0)), jnp.float32)
            e_c = jnp.concatenate([e_c, pad], axis=-1)
            o_c = jnp.concatenate([o_c, pad], axis=-1)
        pair2d = jnp.concatenate([e_c, o_c], axis=-1).reshape(Bb * Hh, two_chunk)
        out2d = jnp.dot(pair2d, perm,
                        preferred_element_type=jnp.float32,
                        precision=lax.Precision.HIGHEST)
        out3d = out2d.reshape(Bb, Hh, two_chunk)
        pieces.append(out3d[:, :, : 2 * (c1 - c0)])
    hx = pieces[0] if len(pieces) == 1 else jnp.concatenate(pieces, axis=-1)  # (B,H,2W)

    # ---- vertical (row) 2-tap pass; rows 2m / 2m+1 go to the two contiguous ----
    # halves of the (B, H, 4W) output block (final NCHW layout after reshape).
    hx_up = jnp.concatenate([hx[:, :1, :], hx[:, :-1, :]], axis=1)   # hx[m-1] (clamped)
    hx_dn = jnp.concatenate([hx[:, 1:, :], hx[:, -1:, :]], axis=1)   # hx[m+1] (clamped)
    o_ref[:, :, : 2 * Ww] = (0.25 * hx_up + 0.75 * hx).astype(o_ref.dtype)  # rows 2m
    o_ref[:, :, 2 * Ww:] = (0.75 * hx + 0.25 * hx_dn).astype(o_ref.dtype)   # rows 2m+1


# ----------------------------------------------------------------------------- #
# Host-side helpers
# ----------------------------------------------------------------------------- #
def _tpu_generation():
    try:
        kind = jax.devices()[0].device_kind.lower()
    except Exception:
        return None
    if "v5 lite" in kind or "v5lite" in kind or "v5e" in kind:
        return "v5e"
    if "v6" in kind:
        return "v6e"
    if "7x" in kind or "v7" in kind:
        return "v7x"
    return None


def _generation_config():
    gen = _tpu_generation()
    if gen == "v7x":    # 64 MiB VMEM, 2 TCs: tighter footprint, >=8 grid steps
        return dict(block_budget=12 << 20, vmem_limit=40 << 20, min_steps=8, chunk_cap=128)
    if gen == "v6e":    # 128 MiB VMEM, 2x256x256 MXU
        return dict(block_budget=24 << 20, vmem_limit=96 << 20, min_steps=2, chunk_cap=128)
    if gen == "v5e":    # 128 MiB VMEM, 128x128 MXU, no bf16 VPU -> keep perm small
        return dict(block_budget=24 << 20, vmem_limit=96 << 20, min_steps=2, chunk_cap=64)
    # Unknown generation: conservative defaults that are safe everywhere.
    return dict(block_budget=8 << 20, vmem_limit=32 << 20, min_steps=2, chunk_cap=64)


def _pick_chunk(W, cap):
    """Interleave chunk width (perm matrix is (2*chunk, 2*chunk))."""
    if W <= cap:
        return W
    for d in range(cap, 7, -1):          # largest divisor of W in [8, cap]
        if W % d == 0:
            return d
    return cap                            # ragged tail handled in-kernel by zero-pad


def _make_perm(chunk):
    """0/1 permutation: [even | odd] (2*chunk) -> interleaved (2*chunk)."""
    k = np.arange(2 * chunk)
    tgt = np.where(k < chunk, 2 * k, 2 * (k - chunk) + 1)
    perm = np.zeros((2 * chunk, 2 * chunk), np.float32)
    perm[k, tgt] = 1.0
    return perm


def _pick_block(NC, H, W, *, budget_bytes, min_steps):
    """Channel-plane block size B (grid uses ceiling division, no divisor search)."""
    # ~28 live f32 words / input element: 2x double-buffered in (W) + out (4W)
    # blocks plus shift / filter / interleave temporaries.
    per_plane = 28 * H * W * 4
    b = max(1, int(budget_bytes // per_plane))
    b = min(b, NC)
    if NC >= min_steps:                   # keep >= min_steps grid iterations
        b = min(b, max(1, NC // min_steps))
    return b


# ----------------------------------------------------------------------------- #
# Wrapper
# ----------------------------------------------------------------------------- #
def upsample_pallas(x):
    """x: (N, C, H, W) -> (N, C, 2H, 2W).  Module defaults (repl pad, filt_size=4,
    stride=2); the separable filter taps are baked into the kernel."""
    N, C, H, W = x.shape
    NC = N * C
    x3 = x.reshape(NC, H, W)

    cfg = _generation_config()
    chunk = _pick_chunk(W, cfg["chunk_cap"])
    perm = jnp.asarray(_make_perm(chunk))
    B = _pick_block(NC, H, W, budget_bytes=cfg["block_budget"],
                    min_steps=cfg["min_steps"])

    out = pl.pallas_call(
        _upsample_kernel,
        out_shape=jax.ShapeDtypeStruct((NC, H, 4 * W), x.dtype),
        grid=(pl.cdiv(NC, B),),
        in_specs=[
            pl.BlockSpec((B, H, W), lambda i: (i, 0, 0)),
            pl.BlockSpec((2 * chunk, 2 * chunk), lambda i: (0, 0)),  # fetched once
        ],
        out_specs=pl.BlockSpec((B, H, 4 * W), lambda i: (i, 0, 0)),
        compiler_params=pltpu.CompilerParams(
            dimension_semantics=("parallel",),
            vmem_limit_bytes=cfg["vmem_limit"],
        ),
    )(x3, perm)

    # (NC, H, 4W) -> (N, C, 2H, 2W): pure metadata reshape, no extra HBM pass.
    return out.reshape(N, C, 2 * H, 2 * W)


# ----------------------------------------------------------------------------- #
# Pure-JAX reference (transposed depthwise conv, exactly the module's forward)
# ----------------------------------------------------------------------------- #
def upsample_ref(x, filt):
    N, C, H, W = x.shape
    xp = jnp.pad(x, ((0, 0), (0, 0), (1, 1), (1, 1)), mode="edge")
    w = jnp.broadcast_to(filt[None, None, :, :], (C, 1, 4, 4))
    wf = w[:, :, ::-1, ::-1]  # flipped kernel (symmetric, kept general)
    y = jax.lax.conv_general_dilated(
        xp, wf,
        window_strides=(1, 1),
        padding=((1, 1), (1, 1)),          # K - 1 - padding = 4 - 1 - 2 = 1
        lhs_dilation=(2, 2),               # stride of the transposed conv
        rhs_dilation=(1, 1),
        dimension_numbers=("NCHW", "OIHW", "NCHW"),
        feature_group_count=C,
        precision=lax.Precision.HIGHEST,
    )
    return y[:, :, 1:-1, 1:-1]             # [1:, 1:] then [:-1, :-1]


if __name__ == "__main__":
    key = jax.random.PRNGKey(0)
    N, C, H, W = 2, 4, 16, 16
    x = jax.random.normal(key, (N, C, H, W), dtype=jnp.float32)

    stride, filt_size = 2, 4
    # Deterministic "buffer" initialization, exactly as the module's __init__.
    filt = jnp.asarray(get_filter(filt_size) * (stride ** 2), dtype=jnp.float32)

    out = jax.block_until_ready(upsample_pallas(x))
    assert out.shape == (N, C, 2 * H, 2 * W), out.shape

    ref = jax.block_until_ready(upsample_ref(x, filt))
    np.testing.assert_allclose(np.asarray(out), np.asarray(ref), rtol=1e-5, atol=1e-5)

    print("KERNEL_OK")
</pallas_src>

<mosaic_0001>
module attributes {stable_mosaic.version = 11 : i64} {
  func.func @_upsample_kernel(%arg0: i32, %arg1: memref<4x16x16xf32, #tpu.memory_space<vmem>>, %arg2: memref<32x32xf32, #tpu.memory_space<vmem>>, %arg3: memref<4x16x64xf32, #tpu.memory_space<vmem>>) attributes {dimension_semantics = [#tpu.dimension_semantics<parallel>], iteration_bounds = array<i64: 2>, scalar_prefetch = 0 : i64, scratch_operands = 0 : i64, tpu.core_type = #tpu.core_type<tc>, window_params = [{transform_indices = @transform_0, window_bounds = array<i64: 4, 16, 16>}, {pipeline_mode = #tpu.pipeline_mode<synchronous>, transform_indices = @transform_1, window_bounds = array<i64: 32, 32>}, {transform_indices = @transform_2, window_bounds = array<i64: 4, 16, 64>}]} {
    %c0 = arith.constant 0 : index
    %c0_0 = arith.constant 0 : index
    %c0_1 = arith.constant 0 : index
    %0 = vector.load %arg1[%c0, %c0_0, %c0_1] : memref<4x16x16xf32, #tpu.memory_space<vmem>>, vector<4x16x16xf32>
    %1 = vector.extract_strided_slice %0 {offsets = [0, 0, 0], sizes = [4, 16, 1], strides = [1, 1, 1]} : vector<4x16x16xf32> to vector<4x16x1xf32>
    %2 = vector.extract_strided_slice %0 {offsets = [0, 0, 0], sizes = [4, 16, 15], strides = [1, 1, 1]} : vector<4x16x16xf32> to vector<4x16x15xf32>
    %3 = tpu.concatenate %1, %2 in 2 : vector<4x16x1xf32>, vector<4x16x15xf32> -> vector<4x16x16xf32>
    %4 = vector.extract_strided_slice %0 {offsets = [0, 0, 1], sizes = [4, 16, 15], strides = [1, 1, 1]} : vector<4x16x16xf32> to vector<4x16x15xf32>
    %5 = vector.extract_strided_slice %0 {offsets = [0, 0, 15], sizes = [4, 16, 1], strides = [1, 1, 1]} : vector<4x16x16xf32> to vector<4x16x1xf32>
    %6 = tpu.concatenate %4, %5 in 2 : vector<4x16x15xf32>, vector<4x16x1xf32> -> vector<4x16x16xf32>
    %cst = arith.constant 2.500000e-01 : f32
    %7 = vector.broadcast %cst : f32 to vector<4x16x16xf32>
    %8 = arith.mulf %7, %3 : vector<4x16x16xf32>
    %cst_2 = arith.constant 7.500000e-01 : f32
    %9 = vector.broadcast %cst_2 : f32 to vector<4x16x16xf32>
    %10 = arith.mulf %9, %0 : vector<4x16x16xf32>
    %11 = arith.addf %8, %10 : vector<4x16x16xf32>
    %cst_3 = arith.constant 7.500000e-01 : f32
    %12 = vector.broadcast %cst_3 : f32 to vector<4x16x16xf32>
    %13 = arith.mulf %12, %0 : vector<4x16x16xf32>
    %cst_4 = arith.constant 2.500000e-01 : f32
    %14 = vector.broadcast %cst_4 : f32 to vector<4x16x16xf32>
    %15 = arith.mulf %14, %6 : vector<4x16x16xf32>
    %16 = arith.addf %13, %15 : vector<4x16x16xf32>
    %c0_5 = arith.constant 0 : index
    %c0_6 = arith.constant 0 : index
    %17 = vector.load %arg2[%c0_5, %c0_6] : memref<32x32xf32, #tpu.memory_space<vmem>>, vector<32x32xf32>
    %18 = tpu.concatenate %11, %16 in 2 : vector<4x16x16xf32>, vector<4x16x16xf32> -> vector<4x16x32xf32>
    %19 = vector.shape_cast %18 : vector<4x16x32xf32> to vector<64x32xf32>
    %cst_7 = arith.constant dense<0.000000e+00> : vector<64x32xf32>
    %20 = tpu.matmul %19, %17, %cst_7 {dimension_numbers = #tpu.dot_dimension_numbers<[1], [0], [0], [1], [0, 0, 1, 1], [], []>, precision = #tpu.contract_precision<fp32>} : vector<64x32xf32>, vector<32x32xf32>, vector<64x32xf32> -> vector<64x32xf32>
    %21 = vector.shape_cast %20 : vector<64x32xf32> to vector<4x16x32xf32>
    %22 = vector.extract_strided_slice %21 {offsets = [0, 0, 0], sizes = [4, 1, 32], strides = [1, 1, 1]} : vector<4x16x32xf32> to vector<4x1x32xf32>
    %23 = vector.extract_strided_slice %21 {offsets = [0, 0, 0], sizes = [4, 15, 32], strides = [1, 1, 1]} : vector<4x16x32xf32> to vector<4x15x32xf32>
    %24 = tpu.concatenate %22, %23 in 1 : vector<4x1x32xf32>, vector<4x15x32xf32> -> vector<4x16x32xf32>
    %25 = vector.extract_strided_slice %21 {offsets = [0, 1, 0], sizes = [4, 15, 32], strides = [1, 1, 1]} : vector<4x16x32xf32> to vector<4x15x32xf32>
    %26 = vector.extract_strided_slice %21 {offsets = [0, 15, 0], sizes = [4, 1, 32], strides = [1, 1, 1]} : vector<4x16x32xf32> to vector<4x1x32xf32>
    %27 = tpu.concatenate %25, %26 in 1 : vector<4x15x32xf32>, vector<4x1x32xf32> -> vector<4x16x32xf32>
    %cst_8 = arith.constant 2.500000e-01 : f32
    %28 = vector.broadcast %cst_8 : f32 to vector<4x16x32xf32>
    %29 = arith.mulf %28, %24 : vector<4x16x32xf32>
    %cst_9 = arith.constant 7.500000e-01 : f32
    %30 = vector.broadcast %cst_9 : f32 to vector<4x16x32xf32>
    %31 = arith.mulf %30, %21 : vector<4x16x32xf32>
    %32 = arith.addf %29, %31 : vector<4x16x32xf32>
    %c0_10 = arith.constant 0 : index
    %c0_11 = arith.constant 0 : index
    %c0_12 = arith.constant 0 : index
    %33 = vector.load %arg3[%c0_10, %c0_11, %c0_12] : memref<4x16x64xf32, #tpu.memory_space<vmem>>, vector<4x16x32xf32>
    tpu.vector_store %arg3[%c0_10, %c0_11, %c0_12], %32 {strides = array<i32>} : memref<4x16x64xf32, #tpu.memory_space<vmem>>, vector<4x16x32xf32>,
    %cst_13 = arith.constant 7.500000e-01 : f32
    %34 = vector.broadcast %cst_13 : f32 to vector<4x16x32xf32>
    %35 = arith.mulf %34, %21 : vector<4x16x32xf32>
    %cst_14 = arith.constant 2.500000e-01 : f32
    %36 = vector.broadcast %cst_14 : f32 to vector<4x16x32xf32>
    %37 = arith.mulf %36, %27 : vector<4x16x32xf32>
    %38 = arith.addf %35, %37 : vector<4x16x32xf32>
    %c0_15 = arith.constant 0 : index
    %c0_16 = arith.constant 0 : index
    %c32 = arith.constant 32 : index
    %39 = vector.load %arg3[%c0_15, %c0_16, %c32] : memref<4x16x64xf32, #tpu.memory_space<vmem>>, vector<4x16x32xf32>
    tpu.vector_store %arg3[%c0_15, %c0_16, %c32], %38 {strides = array<i32>} : memref<4x16x64xf32, #tpu.memory_space<vmem>>, vector<4x16x32xf32>,
    return
  }
  func.func @transform_0(%arg0: i32) -> (i32, i32, i32) {
    %c0_i32 = arith.constant 0 : i32
    %c0_i32_0 = arith.constant 0 : i32
    %c0_i32_1 = arith.constant 0 : i32
    return %arg0, %c0_i32, %c0_i32_0 : i32, i32, i32
  }
  func.func @transform_1(%arg0: i32) -> (i32, i32) {
    %c0_i32 = arith.constant 0 : i32
    %c0_i32_0 = arith.constant 0 : i32
    %c0_i32_1 = arith.constant 0 : i32
    return %c0_i32, %c0_i32_0 : i32, i32
  }
  func.func @transform_2(%arg0: i32) -> (i32, i32, i32) {
    %c0_i32 = arith.constant 0 : i32
    %c0_i32_0 = arith.constant 0 : i32
    %c0_i32_1 = arith.constant 0 : i32
    return %arg0, %c0_i32, %c0_i32_0 : i32, i32, i32
  }
}

</mosaic_0001>

<llo_original>
// kernel: tpu_custom_call.1
$region0: #{tpu_custom_call.1}
  #allocation0 [shape = 'u32[]', space=smem, size = 0x4, offset = 0x4, fixed_abs, tag = 'smem constant byte address 0x4 - core index']
  #allocation1 [shape = 'u32[72,128]{1,0:T(1,128)}', space=vmem, size = 0x9000, scoped, tag = 'internal scratch']
  %s0 = inlined_call_operand.hbm [shape: f32[8,16,16], index: 0, kind: input, shape index: {}]
  %s1 = inlined_call_operand.hbm [shape: f32[32,32], index: 1, kind: input, shape index: {}]
  %s2 = inlined_call_operand.hbm [shape: f32[8,16,64], index: 2, kind: output, shape index: {}]
  %s3 = sld [smem:[#allocation0]]
  $region49: #{tpu_custom_call.1} parent=0
    _
  %s5 = ssub.s32 1, %s3
  %s6 = scalar_select 0, %s5, %s3
  $region1: #{tpu_custom_call.1} parent=0
    #allocation2 [shape = 'u8[65536]{0}', space=vmem, size = 0x10000, scoped, tag = 'input window, operand 0']
    #allocation3 [shape = 's32[2]{0}', space=sflag, size = 0x8, scoped, tag = 'scoped memory for tpu_custom_call.1']
    #allocation4 [shape = 's32[2]{0}', space=sflag, size = 0x8, scoped, tag = 'scoped memory for tpu_custom_call.1']
    #allocation5 [shape = 'u8[16384]{0}', space=vmem, size = 0x4000, scoped, tag = 'input window, operand 1, single buffered']
    #allocation6 [shape = 's32[1]{0}', space=sflag, size = 0x4, scoped, tag = 'scoped memory for tpu_custom_call.1']
    #allocation7 [shape = 'u8[65536]{0}', space=vmem, size = 0x10000, scoped, tag = 'output window, operand 0']
    %7 = vsyncpa [#allocation3], 0
    %s8 = scalar_lea.sflag [#allocation3], 1
    %9 = vsyncpa %s8, 0
    %10 = vsyncpa [#allocation6], 0
    %11 = vsyncpa [#allocation4], 0
    %s12 = scalar_lea.sflag [#allocation4], 1
    %13 = vsyncpa %s12, 0
    loop: start=0, step=1, limit=4
    $region2: #{tpu_custom_call.1} parent=1 // loop_pre_header
      _
    $region3: #{tpu_custom_call.1} parent=1 // loop_header
      %s15 = sphi 0, %s19
      %p16 = scmp.ge.s32.totalorder %s15, 4
      %s25 = sphi 0, %s27
      %s28 = sphi 0, %s25
      %s29 = sphi 0, %s28
      %s45 = sphi 0, %s29
      %s49 = sphi 0, %s49
      %s51 = sphi 0, %s49
      %s52 = sphi 0, %s51
      %s66 = sphi 0, %s52
      %s72 = sphi 0, %s74
      %s75 = sphi 0, %s72
      %s76 = sphi 0, %s75
      %s92 = sphi 0, %s76
    $region4: #{tpu_custom_call.1} parent=1 // loop_header_branch
      %18 = sbr.rel (%p16) target = $region8
    $region5: #{tpu_custom_call.1} parent=1 // loop_body
      %s20 = ssub.s32 %s15, 1
      %s21 = ssub.s32 %s15, 2
      %s22 = sadd.s32 %s15, 1
      %s23 = ssub.s32 %s15, %s22
      %p24 = scmp.eq.s32.totalorder %s23, 0
      %s26 = sadd.s32 %s25, 1
      %s27 = scalar_select %p24, %s25, %s26
      %p30 = pneg %p24
      %p31 = scmp.eq.s32.totalorder %s15, 1
      %p32 = por %p30, %p31
      %p33 = scmp.ne.s32.totalorder %s25, %s28
      %p34 = scmp.eq.s32.totalorder %s15, 0
      %p35 = por %p33, %p34
      %p36 = scmp.ne.s32.totalorder %s25, %s28
      %p37 = scmp.eq.s32.totalorder %s20, 1
      %p38 = por %p36, %p37
      %p39 = scmp.ne.s32.totalorder %s28, %s29
      %p40 = scmp.eq.s32.totalorder %s20, 0
      %p41 = por %p39, %p40
      %p42 = scmp.ne.s32.totalorder %s28, %s29
      %p43 = scmp.eq.s32.totalorder %s21, 1
      %p44 = por %p42, %p43
      %p46 = scmp.ne.s32.totalorder %s29, %s45
      %p47 = scmp.eq.s32.totalorder %s21, 0
      %p48 = por %p46, %p47
      %s50 = sadd.s32 %s49, 1
      %p53 = scmp.eq.s32.totalorder %s15, 1
      %p54 = scmp.ne.s32.totalorder %s49, %s51
      %p55 = scmp.eq.s32.totalorder %s15, 0
      %p56 = por %p54, %p55
      %p57 = scmp.ne.s32.totalorder %s49, %s51
      %p58 = scmp.eq.s32.totalorder %s20, 1
      %p59 = por %p57, %p58
      %p60 = scmp.ne.s32.totalorder %s51, %s52
      %p61 = scmp.eq.s32.totalorder %s20, 0
      %p62 = por %p60, %p61
      %p63 = scmp.ne.s32.totalorder %s51, %s52
      %p64 = scmp.eq.s32.totalorder %s21, 1
      %p65 = por %p63, %p64
      %p67 = scmp.ne.s32.totalorder %s52, %s66
      %p68 = scmp.eq.s32.totalorder %s21, 0
      %p69 = por %p67, %p68
      %s70 = ssub.s32 %s15, %s22
      %p71 = scmp.eq.s32.totalorder %s70, 0
      %s73 = sadd.s32 %s72, 1
      %s74 = scalar_select %p71, %s72, %s73
      %p77 = pneg %p71
      %p78 = scmp.eq.s32.totalorder %s15, 1
      %p79 = por %p77, %p78
      %p80 = scmp.ne.s32.totalorder %s72, %s75
      %p81 = scmp.eq.s32.totalorder %s15, 0
      %p82 = por %p80, %p81
      %p83 = scmp.ne.s32.totalorder %s72, %s75
      %p84 = scmp.eq.s32.totalorder %s20, 1
      %p85 = por %p83, %p84
      %p86 = scmp.ne.s32.totalorder %s75, %s76
      %p87 = scmp.eq.s32.totalorder %s20, 0
      %p88 = por %p86, %p87
      %p89 = scmp.ne.s32.totalorder %s75, %s76
      %p90 = scmp.eq.s32.totalorder %s21, 1
      %p91 = por %p89, %p90
      %p93 = scmp.ne.s32.totalorder %s76, %s92
      %p94 = scmp.eq.s32.totalorder %s21, 0
      %p95 = por %p93, %p94
      %p96 = scmp.le.s32.totalorder 1, %s15
      %p97 = scmp.lt.s32.totalorder %s15, 3
      %p98 = pnand %p96, %p97
      %p99 = pneg %p98
      // Predicated region
      $region9: #{tpu_custom_call.1} parent=5 // pred_check
        _
      $region10: #{tpu_custom_call.1} parent=5 // pred_check_branch
        %101 = sbr.rel (%p98) target = $region12
      $region11: #{tpu_custom_call.1} parent=5 // pred_region
        %s102 = ssub.s32 %s15, 1
        // Predicated region
        $region13: #{tpu_custom_call.1} parent=11 // pred_check
          %p103 = pneg %p62
        $region14: #{tpu_custom_call.1} parent=11 // pred_check_branch
          %105 = sbr.rel (%p103) target = $region16
        $region15: #{tpu_custom_call.1} parent=11 // pred_region
          %107 = vsyncadd [#allocation6], 0
          %s108 = sshll.u32 %s1, 4
          %s109 = int_to_ptr.hbm [resolvable:$true] %s108
          %s110 = sshll.u32 [#allocation5], 4
          %s111 = int_to_ptr.vmem [resolvable:$true] %s110
          %116 = dma.hbm_to_vmem [thread:$0]  %s109, 512, %s111, [#allocation6], 128, 128, 8
        $region16: #{tpu_custom_call.1} parent=11 // pred_fallthru
          _
      $region12: #{tpu_custom_call.1} parent=5 // pred_fallthru
        _
      %p117 = scmp.lt.s32.totalorder %s15, 2
      // Predicated region
      $region17: #{tpu_custom_call.1} parent=5 // pred_check
        %p118 = pneg %p117
      $region18: #{tpu_custom_call.1} parent=5 // pred_check_branch
        %120 = sbr.rel (%p118) target = $region20
      $region19: #{tpu_custom_call.1} parent=5 // pred_region
        // Predicated region
        $region21: #{tpu_custom_call.1} parent=19 // pred_check
          %p121 = pneg %p35
        $region22: #{tpu_custom_call.1} parent=19 // pred_check_branch
          %123 = sbr.rel (%p121) target = $region24
        $region23: #{tpu_custom_call.1} parent=19 // pred_region
          %s124 = sand.u32 %s25, 1
          %s125 = scalar_lea.sflag [#allocation3], %s124
          %s126 = sand.u32 %s25, 1
          %s127 = smul.addr %s126, 64
          %s128 = scalar_lea.vmem [#allocation2], %s127
          %s129 = smul.u32 4, %s15
          %131 = vsyncadd %s125, 0
          %s132 = smul.addr %s129, 2
          %s133 = smul.addr %s132, 8
          %s134 = scalar_lea.hbm %s0, %s133
          %s135 = sshll.u32 %s134, 4
          %s136 = int_to_ptr.hbm [resolvable:$true] %s135
          %s137 = sshll.u32 %s128, 4
          %s138 = int_to_ptr.vmem [resolvable:$true] %s137
          %143 = dma.hbm_to_vmem [thread:$0]  %s136, 1024, %s138, %s125, 128, 128, 8
        $region24: #{tpu_custom_call.1} parent=19 // pred_fallthru
          _
      $region20: #{tpu_custom_call.1} parent=5 // pred_fallthru
        _
      %p144 = scmp.le.s32.totalorder 1, %s15
      %p145 = scmp.lt.s32.totalorder %s15, 3
      %p146 = pnand %p144, %p145
      %p147 = pneg %p146
      // Predicated region
      $region25: #{tpu_custom_call.1} parent=5 // pred_check
        _
      $region26: #{tpu_custom_call.1} parent=5 // pred_check_branch
        %149 = sbr.rel (%p146) target = $region28
      $region27: #{tpu_custom_call.1} parent=5 // pred_region
        %s150 = ssub.s32 %s15, 1
        %s151 = sand.u32 %s28, 1
        %s152 = scalar_lea.sflag [#allocation3], %s151
        %s153 = sand.u32 %s28, 1
        %s154 = smul.addr %s153, 64
        %s155 = scalar_lea.vmem [#allocation2], %s154
        // Predicated region
        $region29: #{tpu_custom_call.1} parent=27 // pred_check
          %p156 = pneg %p41
        $region30: #{tpu_custom_call.1} parent=27 // pred_check_branch
          %158 = sbr.rel (%p156) target = $region32
        $region31: #{tpu_custom_call.1} parent=27 // pred_region
          %160 = dma.done %s152, 1024
        $region32: #{tpu_custom_call.1} parent=27 // pred_fallthru
          _
        // Predicated region
        $region33: #{tpu_custom_call.1} parent=27 // pred_check
          %p161 = pneg %p62
        $region34: #{tpu_custom_call.1} parent=27 // pred_check_branch
          %163 = sbr.rel (%p161) target = $region36
        $region35: #{tpu_custom_call.1} parent=27 // pred_region
          %165 = dma.done [#allocation6], 512
        $region36: #{tpu_custom_call.1} parent=27 // pred_fallthru
          _
        %s166 = sand.u32 %s28, 1
        %s167 = scalar_lea.sflag [#allocation3], %s166
        %s168 = sand.u32 %s28, 1
        %s169 = smul.addr %s168, 64
        %s170 = scalar_lea.vmem [#allocation2], %s169
        %p171 = pneg %p41
        %p172 = pneg %p38
        %p173 = pneg %p62
        %p174 = pneg %p59
        %p175 = pneg %p88
        %p176 = pneg %p85
        %s177 = sand.u32 %s75, 1
        %s178 = scalar_lea.sflag [#allocation4], %s177
        %s179 = sand.u32 %s75, 1
        %s180 = smul.addr %s179, 64
        %s181 = scalar_lea.vmem [#allocation7], %s180
        %s182 = smul.u32 4, %s20
        %s183 = smul.u32 4, %s20
        %v184 = vld [vmem:[%s155] sm:$0xff]
        %v185 = vld [vmem:[%s155 + $0x8] sm:$0xff]
        %v186 = vld [vmem:[%s155 + $0x10] sm:$0xff]
        %v187 = vld [vmem:[%s155 + $0x18] sm:$0xff]
        %v188 = vld [vmem:[%s155 + $0x20] sm:$0xff]
        %v189 = vld [vmem:[%s155 + $0x28] sm:$0xff]
        %v190 = vld [vmem:[%s155 + $0x30] sm:$0xff]
        %v191 = vld [vmem:[%s155 + $0x38] sm:$0xff]
        %200 = vrot.lane.b32.xlu0 %v184, 1
        %v201 = vpop.permute.xlu0 %200
        %202 = vrot.lane.b32.xlu0 %v185, 1
        %v203 = vpop.permute.xlu0 %202
        %204 = vrot.lane.b32.xlu0 %v186, 1
        %v205 = vpop.permute.xlu0 %204
        %206 = vrot.lane.b32.xlu0 %v187, 1
        %v207 = vpop.permute.xlu0 %206
        %208 = vrot.lane.b32.xlu0 %v188, 1
        %v209 = vpop.permute.xlu0 %208
        %210 = vrot.lane.b32.xlu0 %v189, 1
        %v211 = vpop.permute.xlu0 %210
        %212 = vrot.lane.b32.xlu0 %v190, 1
        %v213 = vpop.permute.xlu0 %212
        %214 = vrot.lane.b32.xlu0 %v191, 1
        %v215 = vpop.permute.xlu0 %214
        %vm224 = vcmask 7168
        %v225 = vsel %vm224, %v184, %v201
        %v226 = vsel %vm224, %v185, %v203
        %v227 = vsel %vm224, %v186, %v205
        %v228 = vsel %vm224, %v187, %v207
        %v229 = vsel %vm224, %v188, %v209
        %v230 = vsel %vm224, %v189, %v211
        %v231 = vsel %vm224, %v190, %v213
        %v232 = vsel %vm224, %v191, %v215
        %233 = vrot.lane.b32.xlu0 %v184, 127
        %v234 = vpop.permute.xlu0 %233
        %235 = vrot.lane.b32.xlu0 %v185, 127
        %v236 = vpop.permute.xlu0 %235
        %237 = vrot.lane.b32.xlu0 %v186, 127
        %v238 = vpop.permute.xlu0 %237
        %239 = vrot.lane.b32.xlu0 %v187, 127
        %v240 = vpop.permute.xlu0 %239
        %241 = vrot.lane.b32.xlu0 %v188, 127
        %v242 = vpop.permute.xlu0 %241
        %243 = vrot.lane.b32.xlu0 %v189, 127
        %v244 = vpop.permute.xlu0 %243
        %245 = vrot.lane.b32.xlu0 %v190, 127
        %v246 = vpop.permute.xlu0 %245
        %247 = vrot.lane.b32.xlu0 %v191, 127
        %v248 = vpop.permute.xlu0 %247
        %vm257 = vcmask 121856
        %v258 = vsel %vm257, %v234, %v184
        %v259 = vsel %vm257, %v236, %v185
        %v260 = vsel %vm257, %v238, %v186
        %v261 = vsel %vm257, %v240, %v187
        %v262 = vsel %vm257, %v242, %v188
        %v263 = vsel %vm257, %v244, %v189
        %v264 = vsel %vm257, %v246, %v190
        %v265 = vsel %vm257, %v248, %v191
        %v266 = vmul.f32 %v225, 0.25
        %v267 = vmul.f32 %v226, 0.25
        %v268 = vmul.f32 %v227, 0.25
        %v269 = vmul.f32 %v228, 0.25
        %v270 = vmul.f32 %v229, 0.25
        %v271 = vmul.f32 %v230, 0.25
        %v272 = vmul.f32 %v231, 0.25
        %v273 = vmul.f32 %v232, 0.25
        %v274 = vmul.f32 %v184, 0.75
        %v275 = vmul.f32 %v185, 0.75
        %v276 = vmul.f32 %v186, 0.75
        %v277 = vmul.f32 %v187, 0.75
        %v278 = vmul.f32 %v188, 0.75
        %v279 = vmul.f32 %v189, 0.75
        %v280 = vmul.f32 %v190, 0.75
        %v281 = vmul.f32 %v191, 0.75
        %v282 = vadd.f32 %v266, %v274
        %v283 = vadd.f32 %v267, %v275
        %v284 = vadd.f32 %v268, %v276
        %v285 = vadd.f32 %v269, %v277
        %v286 = vadd.f32 %v270, %v278
        %v287 = vadd.f32 %v271, %v279
        %v288 = vadd.f32 %v272, %v280
        %v289 = vadd.f32 %v273, %v281
        %v290 = vmul.f32 %v258, 0.25
        %v291 = vmul.f32 %v259, 0.25
        %v292 = vmul.f32 %v260, 0.25
        %v293 = vmul.f32 %v261, 0.25
        %v294 = vmul.f32 %v262, 0.25
        %v295 = vmul.f32 %v263, 0.25
        %v296 = vmul.f32 %v264, 0.25
        %v297 = vmul.f32 %v265, 0.25
        %v298 = vadd.f32 %v274, %v290
        %v299 = vadd.f32 %v275, %v291
        %v300 = vadd.f32 %v276, %v292
        %v301 = vadd.f32 %v277, %v293
        %v302 = vadd.f32 %v278, %v294
        %v303 = vadd.f32 %v279, %v295
        %v304 = vadd.f32 %v280, %v296
        %v305 = vadd.f32 %v281, %v297
        %v306 = vld [vmem:[#allocation5] sm:$0xff]
        %v307 = vld [vmem:[#allocation5 + $0x8] sm:$0xff]
        %v308 = vld [vmem:[#allocation5 + $0x10] sm:$0xff]
        %v309 = vld [vmem:[#allocation5 + $0x18] sm:$0xff]
        %318 = vrot.lane.b32.xlu0 %v298, 16
        %v319 = vpop.permute.xlu0 %318
        %320 = vrot.lane.b32.xlu0 %v299, 16
        %v321 = vpop.permute.xlu0 %320
        %322 = vrot.lane.b32.xlu0 %v300, 16
        %v323 = vpop.permute.xlu0 %322
        %324 = vrot.lane.b32.xlu0 %v301, 16
        %v325 = vpop.permute.xlu0 %324
        %326 = vrot.lane.b32.xlu0 %v302, 16
        %v327 = vpop.permute.xlu0 %326
        %328 = vrot.lane.b32.xlu0 %v303, 16
        %v329 = vpop.permute.xlu0 %328
        %330 = vrot.lane.b32.xlu0 %v304, 16
        %v331 = vpop.permute.xlu0 %330
        %332 = vrot.lane.b32.xlu0 %v305, 16
        %v333 = vpop.permute.xlu0 %332
        %vm342 = vcmask 130048
        %v343 = vsel %vm342, %v282, %v319
        %v344 = vsel %vm342, %v283, %v321
        %v345 = vsel %vm342, %v284, %v323
        %v346 = vsel %vm342, %v285, %v325
        %v347 = vsel %vm342, %v286, %v327
        %v348 = vsel %vm342, %v287, %v329
        %v349 = vsel %vm342, %v288, %v331
        %v350 = vsel %vm342, %v289, %v333
        %vm351 = vcmask 261120
        %v353 = vsel %vm351, %v343, 0
        %v356 = vsel %vm351, %v344, 0
        %v359 = vsel %vm351, %v345, 0
        %v362 = vsel %vm351, %v346, 0
        %v365 = vsel %vm351, %v347, 0
        %v368 = vsel %vm351, %v348, 0
        %v371 = vsel %vm351, %v349, 0
        %v374 = vsel %vm351, %v350, 0
        %376 = vmatpush.msra.mxu0 0.0
        %377 = vmatpush.msra.mxu0 0.0
        %378 = vmatpush.msra.mxu0 0.0
        %379 = vmatpush.msra.mxu0 0.0
        %380 = vmatpush.msra.mxu0 0.0
        %381 = vmatpush.msra.mxu0 0.0
        %382 = vmatpush.msra.mxu0 0.0
        %383 = vmatpush.msra.mxu0 0.0
        %384 = vmatpush.msra.mxu0 0.0
        %385 = vmatpush.msra.mxu0 0.0
        %386 = vmatpush.msra.mxu0 0.0
        %387 = vmatpush.msra.mxu0 0.0
        %v388 = vand.u32 %v309, 4294901760
        %389 = vmatpush.msra.mxu0 %v388
        %v390 = vand.u32 %v308, 4294901760
        %391 = vmatpush.msra.mxu0 %v390
        %v392 = vand.u32 %v307, 4294901760
        %393 = vmatpush.msra.mxu0 %v392
        %v394 = vand.u32 %v306, 4294901760
        %395 = vmatpush.msra.mxu0 %v394
        %v396 = vand.u32 %v353, 4294901760
        %v397 = vsub.f32 %v353, %v396
        %v398 = vand.u32 %v397, 4294901760
        %v399 = vsub.f32 %v397, %v398
        %v400 = vand.u32 %v399, 4294901760
        %401 = vmatmul.f32.gmra.mxu0 %v400
        %v402 = vpop.f32.mrf.mxu0
        %v403 = vadd.f32 0.0, %v402
        %v404 = vand.u32 %v356, 4294901760
        %v405 = vsub.f32 %v356, %v404
        %v406 = vand.u32 %v405, 4294901760
        %v407 = vsub.f32 %v405, %v406
        %v408 = vand.u32 %v407, 4294901760
        %409 = vmatmul.f32.gmra.mxu0 %v408
        %v410 = vpop.f32.mrf.mxu0
        %v411 = vadd.f32 0.0, %v410
        %v412 = vand.u32 %v359, 4294901760
        %v413 = vsub.f32 %v359, %v412
        %v414 = vand.u32 %v413, 4294901760
        %v415 = vsub.f32 %v413, %v414
        %v416 = vand.u32 %v415, 4294901760
        %417 = vmatmul.f32.gmra.mxu0 %v416
        %v418 = vpop.f32.mrf.mxu0
        %v419 = vadd.f32 0.0, %v418
        %v420 = vand.u32 %v362, 4294901760
        %v421 = vsub.f32 %v362, %v420
        %v422 = vand.u32 %v421, 4294901760
        %v423 = vsub.f32 %v421, %v422
        %v424 = vand.u32 %v423, 4294901760
        %425 = vmatmul.f32.gmra.mxu0 %v424
        %v426 = vpop.f32.mrf.mxu0
        %v427 = vadd.f32 0.0, %v426
        %v428 = vand.u32 %v365, 4294901760
        %v429 = vsub.f32 %v365, %v428
        %v430 = vand.u32 %v429, 4294901760
        %v431 = vsub.f32 %v429, %v430
        %v432 = vand.u32 %v431, 4294901760
        %433 = vmatmul.f32.gmra.mxu0 %v432
        %v434 = vpop.f32.mrf.mxu0
        %v435 = vadd.f32 0.0, %v434
        %v436 = vand.u32 %v368, 4294901760
        %v437 = vsub.f32 %v368, %v436
        %v438 = vand.u32 %v437, 4294901760
        %v439 = vsub.f32 %v437, %v438
        %v440 = vand.u32 %v439, 4294901760
        %441 = vmatmul.f32.gmra.mxu0 %v440
        %v442 = vpop.f32.mrf.mxu0
        %v443 = vadd.f32 0.0, %v442
        %v444 = vand.u32 %v371, 4294901760
        %v445 = vsub.f32 %v371, %v444
        %v446 = vand.u32 %v445, 4294901760
        %v447 = vsub.f32 %v445, %v446
        %v448 = vand.u32 %v447, 4294901760
        %449 = vmatmul.f32.gmra.mxu0 %v448
        %v450 = vpop.f32.mrf.mxu0
        %v451 = vadd.f32 0.0, %v450
        %v452 = vand.u32 %v374, 4294901760
        %v453 = vsub.f32 %v374, %v452
        %v454 = vand.u32 %v453, 4294901760
        %v455 = vsub.f32 %v453, %v454
        %v456 = vand.u32 %v455, 4294901760
        %457 = vmatmul.f32.gmra.mxu0 %v456
        %v458 = vpop.f32.mrf.mxu0
        %v459 = vadd.f32 0.0, %v458
        %460 = vdwg.mxu0
        %461 = vmatpush.msra.mxu0 0.0
        %462 = vmatpush.msra.mxu0 0.0
        %463 = vmatpush.msra.mxu0 0.0
        %464 = vmatpush.msra.mxu0 0.0
        %465 = vmatpush.msra.mxu0 0.0
        %466 = vmatpush.msra.mxu0 0.0
        %467 = vmatpush.msra.mxu0 0.0
        %468 = vmatpush.msra.mxu0 0.0
        %469 = vmatpush.msra.mxu0 0.0
        %470 = vmatpush.msra.mxu0 0.0
        %471 = vmatpush.msra.mxu0 0.0
        %472 = vmatpush.msra.mxu0 0.0
        %v473 = vand.u32 %v309, 4294901760
        %v474 = vsub.f32 %v309, %v473
        %v475 = vand.u32 %v474, 4294901760
        %v476 = vsub.f32 %v474, %v475
        %v477 = vand.u32 %v476, 4294901760
        %478 = vmatpush.msra.mxu0 %v477
        %v479 = vand.u32 %v308, 4294901760
        %v480 = vsub.f32 %v308, %v479
        %v481 = vand.u32 %v480, 4294901760
        %v482 = vsub.f32 %v480, %v481
        %v483 = vand.u32 %v482, 4294901760
        %484 = vmatpush.msra.mxu0 %v483
        %v485 = vand.u32 %v307, 4294901760
        %v486 = vsub.f32 %v307, %v485
        %v487 = vand.u32 %v486, 4294901760
        %v488 = vsub.f32 %v486, %v487
        %v489 = vand.u32 %v488, 4294901760
        %490 = vmatpush.msra.mxu0 %v489
        %v491 = vand.u32 %v306, 4294901760
        %v492 = vsub.f32 %v306, %v491
        %v493 = vand.u32 %v492, 4294901760
        %v494 = vsub.f32 %v492, %v493
        %v495 = vand.u32 %v494, 4294901760
        %496 = vmatpush.msra.mxu0 %v495
        %v497 = vand.u32 %v353, 4294901760
        %498 = vmatmul.f32.gmra.mxu0 %v497
        %v499 = vpop.f32.mrf.mxu0
        %v500 = vadd.f32 %v403, %v499
        %v501 = vand.u32 %v356, 4294901760
        %502 = vmatmul.f32.gmra.mxu0 %v501
        %v503 = vpop.f32.mrf.mxu0
        %v504 = vadd.f32 %v411, %v503
        %v505 = vand.u32 %v359, 4294901760
        %506 = vmatmul.f32.gmra.mxu0 %v505
        %v507 = vpop.f32.mrf.mxu0
        %v508 = vadd.f32 %v419, %v507
        %v509 = vand.u32 %v362, 4294901760
        %510 = vmatmul.f32.gmra.mxu0 %v509
        %v511 = vpop.f32.mrf.mxu0
        %v512 = vadd.f32 %v427, %v511
        %v513 = vand.u32 %v365, 4294901760
        %514 = vmatmul.f32.gmra.mxu0 %v513
        %v515 = vpop.f32.mrf.mxu0
        %v516 = vadd.f32 %v435, %v515
        %v517 = vand.u32 %v368, 4294901760
        %518 = vmatmul.f32.gmra.mxu0 %v517
        %v519 = vpop.f32.mrf.mxu0
        %v520 = vadd.f32 %v443, %v519
        %v521 = vand.u32 %v371, 4294901760
        %522 = vmatmul.f32.gmra.mxu0 %v521
        %v523 = vpop.f32.mrf.mxu0
        %v524 = vadd.f32 %v451, %v523
        %v525 = vand.u32 %v374, 4294901760
        %526 = vmatmul.f32.gmra.mxu0 %v525
        %v527 = vpop.f32.mrf.mxu0
        %v528 = vadd.f32 %v459, %v527
        %529 = vdwg.mxu0
        %530 = vmatpush.msra.mxu0 0.0
        %531 = vmatpush.msra.mxu0 0.0
        %532 = vmatpush.msra.mxu0 0.0
        %533 = vmatpush.msra.mxu0 0.0
        %534 = vmatpush.msra.mxu0 0.0
        %535 = vmatpush.msra.mxu0 0.0
        %536 = vmatpush.msra.mxu0 0.0
        %537 = vmatpush.msra.mxu0 0.0
        %538 = vmatpush.msra.mxu0 0.0
        %539 = vmatpush.msra.mxu0 0.0
        %540 = vmatpush.msra.mxu0 0.0
        %541 = vmatpush.msra.mxu0 0.0
        %v542 = vand.u32 %v309, 4294901760
        %v543 = vsub.f32 %v309, %v542
        %544 = vmatpush.msra.mxu0 %v543
        %v545 = vand.u32 %v308, 4294901760
        %v546 = vsub.f32 %v308, %v545
        %547 = vmatpush.msra.mxu0 %v546
        %v548 = vand.u32 %v307, 4294901760
        %v549 = vsub.f32 %v307, %v548
        %550 = vmatpush.msra.mxu0 %v549
        %v551 = vand.u32 %v306, 4294901760
        %v552 = vsub.f32 %v306, %v551
        %553 = vmatpush.msra.mxu0 %v552
        %v554 = vand.u32 %v353, 4294901760
        %v555 = vsub.f32 %v353, %v554
        %556 = vmatmul.f32.gmra.mxu0 %v555
        %v557 = vpop.f32.mrf.mxu0
        %v558 = vadd.f32 %v500, %v557
        %v559 = vand.u32 %v356, 4294901760
        %v560 = vsub.f32 %v356, %v559
        %561 = vmatmul.f32.gmra.mxu0 %v560
        %v562 = vpop.f32.mrf.mxu0
        %v563 = vadd.f32 %v504, %v562
        %v564 = vand.u32 %v359, 4294901760
        %v565 = vsub.f32 %v359, %v564
        %566 = vmatmul.f32.gmra.mxu0 %v565
        %v567 = vpop.f32.mrf.mxu0
        %v568 = vadd.f32 %v508, %v567
        %v569 = vand.u32 %v362, 4294901760
        %v570 = vsub.f32 %v362, %v569
        %571 = vmatmul.f32.gmra.mxu0 %v570
        %v572 = vpop.f32.mrf.mxu0
        %v573 = vadd.f32 %v512, %v572
        %v574 = vand.u32 %v365, 4294901760
        %v575 = vsub.f32 %v365, %v574
        %576 = vmatmul.f32.gmra.mxu0 %v575
        %v577 = vpop.f32.mrf.mxu0
        %v578 = vadd.f32 %v516, %v577
        %v579 = vand.u32 %v368, 4294901760
        %v580 = vsub.f32 %v368, %v579
        %581 = vmatmul.f32.gmra.mxu0 %v580
        %v582 = vpop.f32.mrf.mxu0
        %v583 = vadd.f32 %v520, %v582
        %v584 = vand.u32 %v371, 4294901760
        %v585 = vsub.f32 %v371, %v584
        %586 = vmatmul.f32.gmra.mxu0 %v585
        %v587 = vpop.f32.mrf.mxu0
        %v588 = vadd.f32 %v524, %v587
        %v589 = vand.u32 %v374, 4294901760
        %v590 = vsub.f32 %v374, %v589
        %591 = vmatmul.f32.gmra.mxu0 %v590
        %v592 = vpop.f32.mrf.mxu0
        %v593 = vadd.f32 %v528, %v592
        %594 = vdwg.mxu0
        %595 = vmatpush.msra.mxu0 0.0
        %596 = vmatpush.msra.mxu0 0.0
        %597 = vmatpush.msra.mxu0 0.0
        %598 = vmatpush.msra.mxu0 0.0
        %599 = vmatpush.msra.mxu0 0.0
        %600 = vmatpush.msra.mxu0 0.0
        %601 = vmatpush.msra.mxu0 0.0
        %602 = vmatpush.msra.mxu0 0.0
        %603 = vmatpush.msra.mxu0 0.0
        %604 = vmatpush.msra.mxu0 0.0
        %605 = vmatpush.msra.mxu0 0.0
        %606 = vmatpush.msra.mxu0 0.0
        %v607 = vand.u32 %v309, 4294901760
        %608 = vmatpush.msra.mxu0 %v607
        %v609 = vand.u32 %v308, 4294901760
        %610 = vmatpush.msra.mxu0 %v609
        %v611 = vand.u32 %v307, 4294901760
        %612 = vmatpush.msra.mxu0 %v611
        %v613 = vand.u32 %v306, 4294901760
        %614 = vmatpush.msra.mxu0 %v613
        %v615 = vand.u32 %v353, 4294901760
        %v616 = vsub.f32 %v353, %v615
        %v617 = vand.u32 %v616, 4294901760
        %618 = vmatmul.f32.gmra.mxu0 %v617
        %v619 = vpop.f32.mrf.mxu0
        %v620 = vadd.f32 %v558, %v619
        %v621 = vand.u32 %v356, 4294901760
        %v622 = vsub.f32 %v356, %v621
        %v623 = vand.u32 %v622, 4294901760
        %624 = vmatmul.f32.gmra.mxu0 %v623
        %v625 = vpop.f32.mrf.mxu0
        %v626 = vadd.f32 %v563, %v625
        %v627 = vand.u32 %v359, 4294901760
        %v628 = vsub.f32 %v359, %v627
        %v629 = vand.u32 %v628, 4294901760
        %630 = vmatmul.f32.gmra.mxu0 %v629
        %v631 = vpop.f32.mrf.mxu0
        %v632 = vadd.f32 %v568, %v631
        %v633 = vand.u32 %v362, 4294901760
        %v634 = vsub.f32 %v362, %v633
        %v635 = vand.u32 %v634, 4294901760
        %636 = vmatmul.f32.gmra.mxu0 %v635
        %v637 = vpop.f32.mrf.mxu0
        %v638 = vadd.f32 %v573, %v637
        %v639 = vand.u32 %v365, 4294901760
        %v640 = vsub.f32 %v365, %v639
        %v641 = vand.u32 %v640, 4294901760
        %642 = vmatmul.f32.gmra.mxu0 %v641
        %v643 = vpop.f32.mrf.mxu0
        %v644 = vadd.f32 %v578, %v643
        %v645 = vand.u32 %v368, 4294901760
        %v646 = vsub.f32 %v368, %v645
        %v647 = vand.u32 %v646, 4294901760
        %648 = vmatmul.f32.gmra.mxu0 %v647
        %v649 = vpop.f32.mrf.mxu0
        %v650 = vadd.f32 %v583, %v649
        %v651 = vand.u32 %v371, 4294901760
        %v652 = vsub.f32 %v371, %v651
        %v653 = vand.u32 %v652, 4294901760
        %654 = vmatmul.f32.gmra.mxu0 %v653
        %v655 = vpop.f32.mrf.mxu0
        %v656 = vadd.f32 %v588, %v655
        %v657 = vand.u32 %v374, 4294901760
        %v658 = vsub.f32 %v374, %v657
        %v659 = vand.u32 %v658, 4294901760
        %660 = vmatmul.f32.gmra.mxu0 %v659
        %v661 = vpop.f32.mrf.mxu0
        %v662 = vadd.f32 %v593, %v661
        %663 = vdwg.mxu0
        %664 = vmatpush.msra.mxu0 0.0
        %665 = vmatpush.msra.mxu0 0.0
        %666 = vmatpush.msra.mxu0 0.0
        %667 = vmatpush.msra.mxu0 0.0
        %668 = vmatpush.msra.mxu0 0.0
        %669 = vmatpush.msra.mxu0 0.0
        %670 = vmatpush.msra.mxu0 0.0
        %671 = vmatpush.msra.mxu0 0.0
        %672 = vmatpush.msra.mxu0 0.0
        %673 = vmatpush.msra.mxu0 0.0
        %674 = vmatpush.msra.mxu0 0.0
        %675 = vmatpush.msra.mxu0 0.0
        %v676 = vand.u32 %v309, 4294901760
        %v677 = vsub.f32 %v309, %v676
        %v678 = vand.u32 %v677, 4294901760
        %679 = vmatpush.msra.mxu0 %v678
        %v680 = vand.u32 %v308, 4294901760
        %v681 = vsub.f32 %v308, %v680
        %v682 = vand.u32 %v681, 4294901760
        %683 = vmatpush.msra.mxu0 %v682
        %v684 = vand.u32 %v307, 4294901760
        %v685 = vsub.f32 %v307, %v684
        %v686 = vand.u32 %v685, 4294901760
        %687 = vmatpush.msra.mxu0 %v686
        %v688 = vand.u32 %v306, 4294901760
        %v689 = vsub.f32 %v306, %v688
        %v690 = vand.u32 %v689, 4294901760
        %691 = vmatpush.msra.mxu0 %v690
        %v692 = vand.u32 %v353, 4294901760
        %693 = vmatmul.f32.gmra.mxu0 %v692
        %v694 = vpop.f32.mrf.mxu0
        %v695 = vadd.f32 %v620, %v694
        %v696 = vand.u32 %v356, 4294901760
        %697 = vmatmul.f32.gmra.mxu0 %v696
        %v698 = vpop.f32.mrf.mxu0
        %v699 = vadd.f32 %v626, %v698
        %v700 = vand.u32 %v359, 4294901760
        %701 = vmatmul.f32.gmra.mxu0 %v700
        %v702 = vpop.f32.mrf.mxu0
        %v703 = vadd.f32 %v632, %v702
        %v704 = vand.u32 %v362, 4294901760
        %705 = vmatmul.f32.gmra.mxu0 %v704
        %v706 = vpop.f32.mrf.mxu0
        %v707 = vadd.f32 %v638, %v706
        %v708 = vand.u32 %v365, 4294901760
        %709 = vmatmul.f32.gmra.mxu0 %v708
        %v710 = vpop.f32.mrf.mxu0
        %v711 = vadd.f32 %v644, %v710
        %v712 = vand.u32 %v368, 4294901760
        %713 = vmatmul.f32.gmra.mxu0 %v712
        %v714 = vpop.f32.mrf.mxu0
        %v715 = vadd.f32 %v650, %v714
        %v716 = vand.u32 %v371, 4294901760
        %717 = vmatmul.f32.gmra.mxu0 %v716
        %v718 = vpop.f32.mrf.mxu0
        %v719 = vadd.f32 %v656, %v718
        %v720 = vand.u32 %v374, 4294901760
        %721 = vmatmul.f32.gmra.mxu0 %v720
        %v722 = vpop.f32.mrf.mxu0
        %v723 = vadd.f32 %v662, %v722
        %724 = vdwg.mxu0
        %725 = vmatpush.msra.mxu0 0.0
        %726 = vmatpush.msra.mxu0 0.0
        %727 = vmatpush.msra.mxu0 0.0
        %728 = vmatpush.msra.mxu0 0.0
        %729 = vmatpush.msra.mxu0 0.0
        %730 = vmatpush.msra.mxu0 0.0
        %731 = vmatpush.msra.mxu0 0.0
        %732 = vmatpush.msra.mxu0 0.0
        %733 = vmatpush.msra.mxu0 0.0
        %734 = vmatpush.msra.mxu0 0.0
        %735 = vmatpush.msra.mxu0 0.0
        %736 = vmatpush.msra.mxu0 0.0
        %v737 = vand.u32 %v309, 4294901760
        %738 = vmatpush.msra.mxu0 %v737
        %v739 = vand.u32 %v308, 4294901760
        %740 = vmatpush.msra.mxu0 %v739
        %v741 = vand.u32 %v307, 4294901760
        %742 = vmatpush.msra.mxu0 %v741
        %v743 = vand.u32 %v306, 4294901760
        %744 = vmatpush.msra.mxu0 %v743
        %v745 = vand.u32 %v353, 4294901760
        %746 = vmatmul.f32.gmra.mxu0 %v745
        %v747 = vpop.f32.mrf.mxu0
        %v748 = vadd.f32 %v695, %v747
        %v749 = vand.u32 %v356, 4294901760
        %750 = vmatmul.f32.gmra.mxu0 %v749
        %v751 = vpop.f32.mrf.mxu0
        %v752 = vadd.f32 %v699, %v751
        %v753 = vand.u32 %v359, 4294901760
        %754 = vmatmul.f32.gmra.mxu0 %v753
        %v755 = vpop.f32.mrf.mxu0
        %v756 = vadd.f32 %v703, %v755
        %v757 = vand.u32 %v362, 4294901760
        %758 = vmatmul.f32.gmra.mxu0 %v757
        %v759 = vpop.f32.mrf.mxu0
        %v760 = vadd.f32 %v707, %v759
        %v761 = vand.u32 %v365, 4294901760
        %762 = vmatmul.f32.gmra.mxu0 %v761
        %v763 = vpop.f32.mrf.mxu0
        %v764 = vadd.f32 %v711, %v763
        %v765 = vand.u32 %v368, 4294901760
        %766 = vmatmul.f32.gmra.mxu0 %v765
        %v767 = vpop.f32.mrf.mxu0
        %v768 = vadd.f32 %v715, %v767
        %v769 = vand.u32 %v371, 4294901760
        %770 = vmatmul.f32.gmra.mxu0 %v769
        %v771 = vpop.f32.mrf.mxu0
        %v772 = vadd.f32 %v719, %v771
        %v773 = vand.u32 %v374, 4294901760
        %774 = vmatmul.f32.gmra.mxu0 %v773
        %v775 = vpop.f32.mrf.mxu0
        %v776 = vadd.f32 %v723, %v775
        %777 = vdwg.mxu0
        %vm786 = vcmask 1040384
        %v787 = vrot.slane %v748, 7
        %v788 = vrot.slane %v752, 7
        %v789 = vsel %vm786, %v787, %v788
        %v790 = vrot.slane %v756, 7
        %v791 = vrot.slane %v760, 7
        %v792 = vsel %vm786, %v790, %v791
        %v793 = vrot.slane %v764, 7
        %v794 = vrot.slane %v768, 7
        %v795 = vsel %vm786, %v793, %v794
        %v796 = vrot.slane %v772, 7
        %v797 = vrot.slane %v776, 7
        %v798 = vsel %vm786, %v796, %v797
        %v807 = vsel %vm786, %v748, %v787
        %v808 = vsel %vm786, %v756, %v790
        %v809 = vsel %vm786, %v764, %v793
        %v810 = vsel %vm786, %v772, %v796
        %vm811 = vcmask 1046528
        %v812 = vrot.slane %v748, 1
        %v813 = vrot.slane %v752, 1
        %v814 = vsel %vm811, %v812, %v813
        %v815 = vrot.slane %v756, 1
        %v816 = vrot.slane %v760, 1
        %v817 = vsel %vm811, %v815, %v816
        %v818 = vrot.slane %v764, 1
        %v819 = vrot.slane %v768, 1
        %v820 = vsel %vm811, %v818, %v819
        %v821 = vrot.slane %v772, 1
        %v822 = vrot.slane %v776, 1
        %v823 = vsel %vm811, %v821, %v822
        %v832 = vsel %vm811, %v813, %v752
        %v833 = vsel %vm811, %v816, %v760
        %v834 = vsel %vm811, %v819, %v768
        %v835 = vsel %vm811, %v822, %v776
        %v836 = vmul.f32 %v807, 0.25
        %v837 = vmul.f32 %v789, 0.25
        %v838 = vmul.f32 %v808, 0.25
        %v839 = vmul.f32 %v792, 0.25
        %v840 = vmul.f32 %v809, 0.25
        %v841 = vmul.f32 %v795, 0.25
        %v842 = vmul.f32 %v810, 0.25
        %v843 = vmul.f32 %v798, 0.25
        %v844 = vmul.f32 %v748, 0.75
        %v845 = vmul.f32 %v752, 0.75
        %v846 = vmul.f32 %v756, 0.75
        %v847 = vmul.f32 %v760, 0.75
        %v848 = vmul.f32 %v764, 0.75
        %v849 = vmul.f32 %v768, 0.75
        %v850 = vmul.f32 %v772, 0.75
        %v851 = vmul.f32 %v776, 0.75
        %v852 = vadd.f32 %v836, %v844
        %v853 = vadd.f32 %v837, %v845
        %v854 = vadd.f32 %v838, %v846
        %v855 = vadd.f32 %v839, %v847
        %v856 = vadd.f32 %v840, %v848
        %v857 = vadd.f32 %v841, %v849
        %v858 = vadd.f32 %v842, %v850
        %v859 = vadd.f32 %v843, %v851
        %860 = vst.msk [vmem:[%s181] sm:$0xff] %vm351, %v852
        %861 = vst.msk [vmem:[%s181 + $0x8] sm:$0xff] %vm351, %v853
        %862 = vst.msk [vmem:[%s181 + $0x10] sm:$0xff] %vm351, %v854
        %863 = vst.msk [vmem:[%s181 + $0x18] sm:$0xff] %vm351, %v855
        %864 = vst.msk [vmem:[%s181 + $0x20] sm:$0xff] %vm351, %v856
        %865 = vst.msk [vmem:[%s181 + $0x28] sm:$0xff] %vm351, %v857
        %866 = vst.msk [vmem:[%s181 + $0x30] sm:$0xff] %vm351, %v858
        %867 = vst.msk [vmem:[%s181 + $0x38] sm:$0xff] %vm351, %v859
        %v868 = vmul.f32 %v814, 0.25
        %v869 = vmul.f32 %v832, 0.25
        %v870 = vmul.f32 %v817, 0.25
        %v871 = vmul.f32 %v833, 0.25
        %v872 = vmul.f32 %v820, 0.25
        %v873 = vmul.f32 %v834, 0.25
        %v874 = vmul.f32 %v823, 0.25
        %v875 = vmul.f32 %v835, 0.25
        %v876 = vadd.f32 %v844, %v868
        %v877 = vadd.f32 %v845, %v869
        %v878 = vadd.f32 %v846, %v870
        %v879 = vadd.f32 %v847, %v871
        %v880 = vadd.f32 %v848, %v872
        %v881 = vadd.f32 %v849, %v873
        %v882 = vadd.f32 %v850, %v874
        %v883 = vadd.f32 %v851, %v875
        %892 = vrot.lane.b32.xlu0 %v876, 32
        %v893 = vpop.permute.xlu0 %892
        %894 = vrot.lane.b32.xlu0 %v877, 32
        %v895 = vpop.permute.xlu0 %894
        %896 = vrot.lane.b32.xlu0 %v878, 32
        %v897 = vpop.permute.xlu0 %896
        %898 = vrot.lane.b32.xlu0 %v879, 32
        %v899 = vpop.permute.xlu0 %898
        %900 = vrot.lane.b32.xlu0 %v880, 32
        %v901 = vpop.permute.xlu0 %900
        %902 = vrot.lane.b32.xlu0 %v881, 32
        %v903 = vpop.permute.xlu0 %902
        %904 = vrot.lane.b32.xlu0 %v882, 32
        %v905 = vpop.permute.xlu0 %904
        %906 = vrot.lane.b32.xlu0 %v883, 32
        %v907 = vpop.permute.xlu0 %906
        %vm916 = vcmask 523520
        %917 = vst.msk [vmem:[%s181] sm:$0xff] %vm916, %v893
        %918 = vst.msk [vmem:[%s181 + $0x8] sm:$0xff] %vm916, %v895
        %919 = vst.msk [vmem:[%s181 + $0x10] sm:$0xff] %vm916, %v897
        %920 = vst.msk [vmem:[%s181 + $0x18] sm:$0xff] %vm916, %v899
        %921 = vst.msk [vmem:[%s181 + $0x20] sm:$0xff] %vm916, %v901
        %922 = vst.msk [vmem:[%s181 + $0x28] sm:$0xff] %vm916, %v903
        %923 = vst.msk [vmem:[%s181 + $0x30] sm:$0xff] %vm916, %v905
        %924 = vst.msk [vmem:[%s181 + $0x38] sm:$0xff] %vm916, %v907
        %s925 = sand.u32 %s75, 1
        %s926 = scalar_lea.sflag [#allocation4], %s925
        %s927 = sand.u32 %s75, 1
        %s928 = smul.addr %s927, 64
        %s929 = scalar_lea.vmem [#allocation7], %s928
        // Predicated region
        $region37: #{tpu_custom_call.1} parent=27 // pred_check
          %p930 = pneg %p85
        $region38: #{tpu_custom_call.1} parent=27 // pred_check_branch
          %932 = sbr.rel (%p930) target = $region40
        $region39: #{tpu_custom_call.1} parent=27 // pred_region
          %s933 = smul.u32 4, %s20
          %935 = vsyncadd %s926, 0
          %s936 = smul.addr %s933, 2
          %s937 = smul.addr %s936, 8
          %s938 = scalar_lea.hbm %s2, %s937
          %s939 = sshll.u32 %s929, 4
          %s940 = int_to_ptr.vmem [resolvable:$true] %s939
          %s941 = sshll.u32 %s938, 4
          %s942 = int_to_ptr.hbm [resolvable:$true] %s941
          %947 = dma.vmem_to_hbm [thread:$0]  %s940, 1024, %s942, %s926, 128, 128, 8
        $region40: #{tpu_custom_call.1} parent=27 // pred_fallthru
          _
      $region28: #{tpu_custom_call.1} parent=5 // pred_fallthru
        _
      %p948 = scmp.le.s32.totalorder 2, %s15
      // Predicated region
      $region41: #{tpu_custom_call.1} parent=5 // pred_check
        %p949 = pneg %p948
      $region42: #{tpu_custom_call.1} parent=5 // pred_check_branch
        %951 = sbr.rel (%p949) target = $region44
      $region43: #{tpu_custom_call.1} parent=5 // pred_region
        %s952 = ssub.s32 %s15, 2
        // Predicated region
        $region45: #{tpu_custom_call.1} parent=43 // pred_check
          %p953 = pneg %p91
        $region46: #{tpu_custom_call.1} parent=43 // pred_check_branch
          %955 = sbr.rel (%p953) target = $region48
        $region47: #{tpu_custom_call.1} parent=43 // pred_region
          %s956 = sand.u32 %s76, 1
          %s957 = scalar_lea.sflag [#allocation4], %s956
          %s958 = sand.u32 %s76, 1
          %s959 = smul.addr %s958, 64
          %s960 = scalar_lea.vmem [#allocation7], %s959
          %962 = dma.done %s957, 1024
        $region48: #{tpu_custom_call.1} parent=43 // pred_fallthru
          _
      $region44: #{tpu_custom_call.1} parent=5 // pred_fallthru
        _
    $region6: #{tpu_custom_call.1} parent=1 // loop_footer
      %s19 = sadd.s32 1, %s15
    $region7: #{tpu_custom_call.1} parent=1 // loop_footer_branch
      %14 = sbr.rel target = $region3
    $region8: #{tpu_custom_call.1} parent=1 // loop_exit
      _
    %963 = vsyncpa [#allocation3], 1
    %s964 = scalar_lea.sflag [#allocation3], 1
    %965 = vsyncpa %s964, 1
    %966 = vsyncpa [#allocation6], 1
    %967 = vsyncpa [#allocation4], 1
    %s968 = scalar_lea.sflag [#allocation4], 1
    %969 = vsyncpa %s968, 1

</llo_original>
